<compile_context>
chip_gen: v6e
topology: v6e:2x2x1
jax: 0.10.0
libtpu: 0.0.40
codegen_flags: <defaults>
</compile_context>

<pallas_src>
import functools

import jax
import jax.numpy as jnp
from jax.experimental import pallas as pl
from jax.experimental.pallas import tpu as pltpu

_NCORES = 2                              # leading "parallel" grid axis (v7x megacore)
_BLOCK_BUDGET_BYTES = 2 * 1024 * 1024    # per input block (gets double-buffered)
_VMEM_LIMIT_BYTES = 48 * 1024 * 1024     # > 16/32 MiB scoped defaults, < 64 MiB v7x physical


def _round_up(a, m):
    return ((a + m - 1) // m) * m


def _cdiv(a, b):
    return -(-a // b)


def _tv_kernel(x_ref, h_ref, w_ref):
    """One grid step: a (TB, H, W) block of image slices.

    h_ref: (1, 1, W)   per-core resident accumulator for sum(dh^2)
    w_ref: (1, 1, W-1) per-core resident accumulator for sum(dw^2)
    """
    @pl.when(pl.program_id(1) == 0)
    def _():
        h_ref[...] = jnp.zeros_like(h_ref)
        w_ref[...] = jnp.zeros_like(w_ref)

    x = x_ref[...]                                   # (TB, H, W), native dtype
    dh = (x[:, 1:, :] - x[:, :-1, :]).astype(jnp.float32)   # vertical diffs
    dw = (x[:, :, 1:] - x[:, :, :-1]).astype(jnp.float32)   # horizontal diffs

    # Lane-parallel partial reductions: first over the image-batch axis (pure
    # VPU adds), then one small sublane reduce.  Lanes are collapsed only once,
    # in the wrapper, so there is no per-step scalar RMW chain.
    ph = jnp.sum(dh * dh, axis=0, keepdims=True)     # (1, H-1, W)
    ph = jnp.sum(ph, axis=1, keepdims=True)          # (1, 1, W)
    pw = jnp.sum(dw * dw, axis=0, keepdims=True)     # (1, H, W-1)
    pw = jnp.sum(pw, axis=1, keepdims=True)          # (1, 1, W-1)

    h_ref[...] += ph
    w_ref[...] += pw


@functools.partial(jax.jit, static_argnames=("tv_loss_weight",))
def tv_loss(x, tv_loss_weight=1.0):
    """TVLoss.forward for NCHW input `x` (any float dtype)."""
    b, c, h, w = x.shape
    n = b * c
    x_flat = x.reshape(n, h, w)

    # --- pick the image-batch tile TB from the *padded* VMEM footprint ------
    itemsize = jnp.dtype(x.dtype).itemsize
    sublane = max(8, 32 // itemsize)                 # 8 (f32), 16 (bf16), ...
    padded_img_bytes = _round_up(h, sublane) * _round_up(w, 128) * itemsize
    tb = max(1, min(_BLOCK_BUDGET_BYTES // padded_img_bytes, _cdiv(n, _NCORES)))
    # TODO(synk): for single images whose padded footprint exceeds the VMEM
    # budget, additionally tile along H with boundary-row handling; not needed
    # for typical image sizes.

    blocks_per_core = _cdiv(n, tb * _NCORES)
    n_pad = _NCORES * blocks_per_core * tb
    if n_pad != n:
        # all-zero padded images contribute 0 to both sums
        x_flat = jnp.pad(x_flat, ((0, n_pad - n), (0, 0), (0, 0)))

    acc_h, acc_w = pl.pallas_call(
        _tv_kernel,
        out_shape=(
            jax.ShapeDtypeStruct((_NCORES, 1, w), jnp.float32),
            jax.ShapeDtypeStruct((_NCORES, 1, w - 1), jnp.float32),
        ),
        grid_spec=pltpu.PrefetchScalarGridSpec(
            num_scalar_prefetch=0,
            grid=(_NCORES, blocks_per_core),
            in_specs=[
                pl.BlockSpec(
                    (tb, h, w),
                    lambda p, i: (p * blocks_per_core + i, 0, 0),
                ),
            ],
            out_specs=[
                pl.BlockSpec((1, 1, w), lambda p, i: (p, 0, 0)),
                pl.BlockSpec((1, 1, w - 1), lambda p, i: (p, 0, 0)),
            ],
        ),
        compiler_params=pltpu.CompilerParams(
            dimension_semantics=("parallel", "arbitrary"),
            vmem_limit_bytes=_VMEM_LIMIT_BYTES,
        ),
        cost_estimate=pl.CostEstimate(
            flops=6 * n * h * w,
            transcendentals=0,
            bytes_accessed=n * h * w * itemsize + 2 * _NCORES * w * 4,
        ),
    )(x_flat)

    # Tiny final reduction + normalization (matches the PyTorch module).
    h_tv = jnp.sum(acc_h)
    w_tv = jnp.sum(acc_w)
    count_h = c * (h - 1) * w
    count_w = c * h * (w - 1)
    return tv_loss_weight * 2.0 * (h_tv / count_h + w_tv / count_w) / b


def _tv_loss_ref(x, tv_loss_weight=1.0):
    """Pure-JAX reference mirroring the PyTorch module exactly."""
    b, c, h, w = x.shape
    count_h = c * (h - 1) * w
    count_w = c * h * (w - 1)
    h_tv = jnp.sum((x[:, :, 1:, :] - x[:, :, : h - 1, :]) ** 2)
    w_tv = jnp.sum((x[:, :, :, 1:] - x[:, :, :, : w - 1]) ** 2)
    return tv_loss_weight * 2.0 * (h_tv / count_h + w_tv / count_w) / b


if __name__ == "__main__":
    key = jax.random.PRNGKey(0)
    x = jax.random.normal(key, (2, 4, 16, 16), dtype=jnp.float32)  # NCHW

    out = tv_loss(x, tv_loss_weight=1.0)
    out = jax.block_until_ready(out)

    ref = _tv_loss_ref(x, tv_loss_weight=1.0)
    assert jnp.allclose(out, ref, rtol=1e-5, atol=1e-5), (out, ref)

    print("KERNEL_OK")
</pallas_src>

<mosaic_0001>
module attributes {stable_mosaic.version = 11 : i64} {
  func.func @_tv_kernel(%arg0: i32, %arg1: i32, %arg2: memref<4x16x16xf32, #tpu.memory_space<vmem>>, %arg3: memref<1x1x16xf32, #tpu.memory_space<vmem>>, %arg4: memref<1x1x15xf32, #tpu.memory_space<vmem>>) attributes {dimension_semantics = [#tpu.dimension_semantics<parallel>, #tpu.dimension_semantics<arbitrary>], iteration_bounds = array<i64: 2, 1>, scalar_prefetch = 0 : i64, scratch_operands = 0 : i64, tpu.core_type = #tpu.core_type<tc>, window_params = [{transform_indices = @transform_0, window_bounds = array<i64: 4, 16, 16>}, {transform_indices = @transform_1, window_bounds = array<i64: 1, 1, 16>}, {transform_indices = @transform_2, window_bounds = array<i64: 1, 1, 15>}]} {
    %c0_i32 = arith.constant 0 : i32
    %0 = arith.cmpi eq, %arg1, %c0_i32 : i32
    %1 = arith.extui %0 : i1 to i32
    %c0_i32_0 = arith.constant 0 : i32
    %2 = arith.cmpi ne, %1, %c0_i32_0 : i32
    scf.if %2 {
      %cst_18 = arith.constant 0.000000e+00 : f32
      %26 = vector.broadcast %cst_18 : f32 to vector<1x1x16xf32>
      %c0_19 = arith.constant 0 : index
      %c0_20 = arith.constant 0 : index
      %c0_21 = arith.constant 0 : index
      %27 = vector.load %arg3[%c0_19, %c0_20, %c0_21] : memref<1x1x16xf32, #tpu.memory_space<vmem>>, vector<1x1x16xf32>
      tpu.vector_store %arg3[%c0_19, %c0_20, %c0_21], %26 {strides = array<i32>} : memref<1x1x16xf32, #tpu.memory_space<vmem>>, vector<1x1x16xf32>,
      %cst_22 = arith.constant 0.000000e+00 : f32
      %28 = vector.broadcast %cst_22 : f32 to vector<1x1x15xf32>
      %c0_23 = arith.constant 0 : index
      %c0_24 = arith.constant 0 : index
      %c0_25 = arith.constant 0 : index
      %29 = vector.load %arg4[%c0_23, %c0_24, %c0_25] : memref<1x1x15xf32, #tpu.memory_space<vmem>>, vector<1x1x15xf32>
      tpu.vector_store %arg4[%c0_23, %c0_24, %c0_25], %28 {strides = array<i32>} : memref<1x1x15xf32, #tpu.memory_space<vmem>>, vector<1x1x15xf32>,
    } else {
    }
    %c0 = arith.constant 0 : index
    %c0_1 = arith.constant 0 : index
    %c0_2 = arith.constant 0 : index
    %3 = vector.load %arg2[%c0, %c0_1, %c0_2] : memref<4x16x16xf32, #tpu.memory_space<vmem>>, vector<4x16x16xf32>
    %4 = vector.extract_strided_slice %3 {offsets = [0, 1, 0], sizes = [4, 15, 16], strides = [1, 1, 1]} : vector<4x16x16xf32> to vector<4x15x16xf32>
    %5 = vector.extract_strided_slice %3 {offsets = [0, 0, 0], sizes = [4, 15, 16], strides = [1, 1, 1]} : vector<4x16x16xf32> to vector<4x15x16xf32>
    %6 = arith.subf %4, %5 : vector<4x15x16xf32>
    %7 = vector.extract_strided_slice %3 {offsets = [0, 0, 1], sizes = [4, 16, 15], strides = [1, 1, 1]} : vector<4x16x16xf32> to vector<4x16x15xf32>
    %8 = vector.extract_strided_slice %3 {offsets = [0, 0, 0], sizes = [4, 16, 15], strides = [1, 1, 1]} : vector<4x16x16xf32> to vector<4x16x15xf32>
    %9 = arith.subf %7, %8 : vector<4x16x15xf32>
    %10 = arith.mulf %6, %6 : vector<4x15x16xf32>
    %cst = arith.constant dense<0.000000e+00> : vector<15x16xf32>
    %11 = vector.multi_reduction <add>, %10, %cst [0] : vector<4x15x16xf32> to vector<15x16xf32>
    %12 = vector.shape_cast %11 : vector<15x16xf32> to vector<1x15x16xf32>
    %cst_3 = arith.constant dense<0.000000e+00> : vector<1x16xf32>
    %13 = vector.multi_reduction <add>, %12, %cst_3 [1] : vector<1x15x16xf32> to vector<1x16xf32>
    %14 = vector.shape_cast %13 : vector<1x16xf32> to vector<1x1x16xf32>
    %15 = arith.mulf %9, %9 : vector<4x16x15xf32>
    %cst_4 = arith.constant dense<0.000000e+00> : vector<16x15xf32>
    %16 = vector.multi_reduction <add>, %15, %cst_4 [0] : vector<4x16x15xf32> to vector<16x15xf32>
    %17 = vector.shape_cast %16 : vector<16x15xf32> to vector<1x16x15xf32>
    %cst_5 = arith.constant dense<0.000000e+00> : vector<1x15xf32>
    %18 = vector.multi_reduction <add>, %17, %cst_5 [1] : vector<1x16x15xf32> to vector<1x15xf32>
    %19 = vector.shape_cast %18 : vector<1x15xf32> to vector<1x1x15xf32>
    %c0_6 = arith.constant 0 : index
    %c0_7 = arith.constant 0 : index
    %c0_8 = arith.constant 0 : index
    %20 = vector.load %arg3[%c0_6, %c0_7, %c0_8] : memref<1x1x16xf32, #tpu.memory_space<vmem>>, vector<1x1x16xf32>
    %21 = arith.addf %20, %14 : vector<1x1x16xf32>
    %c0_9 = arith.constant 0 : index
    %c0_10 = arith.constant 0 : index
    %c0_11 = arith.constant 0 : index
    %22 = vector.load %arg3[%c0_9, %c0_10, %c0_11] : memref<1x1x16xf32, #tpu.memory_space<vmem>>, vector<1x1x16xf32>
    tpu.vector_store %arg3[%c0_9, %c0_10, %c0_11], %21 {strides = array<i32>} : memref<1x1x16xf32, #tpu.memory_space<vmem>>, vector<1x1x16xf32>,
    %c0_12 = arith.constant 0 : index
    %c0_13 = arith.constant 0 : index
    %c0_14 = arith.constant 0 : index
    %23 = vector.load %arg4[%c0_12, %c0_13, %c0_14] : memref<1x1x15xf32, #tpu.memory_space<vmem>>, vector<1x1x15xf32>
    %24 = arith.addf %23, %19 : vector<1x1x15xf32>
    %c0_15 = arith.constant 0 : index
    %c0_16 = arith.constant 0 : index
    %c0_17 = arith.constant 0 : index
    %25 = vector.load %arg4[%c0_15, %c0_16, %c0_17] : memref<1x1x15xf32, #tpu.memory_space<vmem>>, vector<1x1x15xf32>
    tpu.vector_store %arg4[%c0_15, %c0_16, %c0_17], %24 {strides = array<i32>} : memref<1x1x15xf32, #tpu.memory_space<vmem>>, vector<1x1x15xf32>,
    return
  }
  func.func @transform_0(%arg0: i32, %arg1: i32) -> (i32, i32, i32) {
    %c1_i32 = arith.constant 1 : i32
    %0 = arith.muli %arg0, %c1_i32 : i32
    %1 = arith.addi %0, %arg1 : i32
    %c0_i32 = arith.constant 0 : i32
    %c0_i32_0 = arith.constant 0 : i32
    %c0_i32_1 = arith.constant 0 : i32
    return %1, %c0_i32, %c0_i32_0 : i32, i32, i32
  }
  func.func @transform_1(%arg0: i32, %arg1: i32) -> (i32, i32, i32) {
    %c0_i32 = arith.constant 0 : i32
    %c0_i32_0 = arith.constant 0 : i32
    %c0_i32_1 = arith.constant 0 : i32
    return %arg0, %c0_i32, %c0_i32_0 : i32, i32, i32
  }
  func.func @transform_2(%arg0: i32, %arg1: i32) -> (i32, i32, i32) {
    %c0_i32 = arith.constant 0 : i32
    %c0_i32_0 = arith.constant 0 : i32
    %c0_i32_1 = arith.constant 0 : i32
    return %arg0, %c0_i32, %c0_i32_0 : i32, i32, i32
  }
}

</mosaic_0001>

<llo_original>
// kernel: tv_loss.1
$region0: #{tv_loss.1}
  #allocation0 [shape = 'u32[]', space=smem, size = 0x4, offset = 0x4, fixed_abs, tag = 'smem constant byte address 0x4 - core index']
  #allocation1 [shape = 'u32[144,128]{1,0:T(1,128)}', space=vmem, size = 0x12000, scoped, tag = 'internal scratch']
  %s0 = inlined_call_operand.hbm [shape: f32[8,16,16], index: 0, kind: input, shape index: {}]
  %s1 = inlined_call_operand.vmem [shape: f32[2,1,16], index: 1, kind: output, shape index: {0}]
  %s2 = inlined_call_operand.vmem [shape: f32[2,1,15], index: 2, kind: output, shape index: {1}]
  %3 = xla_tuple %s1, %s2
  %s4 = sld [smem:[#allocation0]]
  $region53: #{tv_loss.1} parent=0
    _
  %s6 = ssub.s32 1, %s4
  %s7 = scalar_select 0, %s6, %s4
  $region1: #{tv_loss.1} parent=0
    #allocation2 [shape = 'u8[65536]{0}', space=vmem, size = 0x10000, scoped, tag = 'input window, operand 0']
    #allocation3 [shape = 's32[2]{0}', space=sflag, size = 0x8, scoped, tag = 'scoped memory for tv_loss.1']
    %8 = vsyncpa [#allocation3], 0
    %s9 = scalar_lea.sflag [#allocation3], 1
    %10 = vsyncpa %s9, 0
    loop: start=0, step=1, limit=4
    $region2: #{tv_loss.1} parent=1 // loop_pre_header
      _
    $region3: #{tv_loss.1} parent=1 // loop_header
      %s12 = sphi 0, %s16
      %p13 = scmp.ge.s32.totalorder %s12, 4
      %s19 = sphi 0, %s31
      %s20 = sphi 0, %s27
      %s21 = sphi 0, %s19
      %s22 = sphi 0, %s20
      %s23 = sphi 0, %s21
      %s24 = sphi 0, %s22
      %s36 = sphi 0, %s38
      %s39 = sphi 0, %s36
      %s40 = sphi 0, %s39
      %s56 = sphi 0, %s40
      %s62 = sphi 0, %s64
      %s65 = sphi 0, %s62
      %s66 = sphi 0, %s65
      %s82 = sphi 0, %s66
      %s88 = sphi 0, %s90
      %s91 = sphi 0, %s88
      %s92 = sphi 0, %s91
      %s108 = sphi 0, %s92
    $region4: #{tv_loss.1} parent=1 // loop_header_branch
      %15 = sbr.rel (%p13) target = $region8
    $region5: #{tv_loss.1} parent=1 // loop_body
      %s17 = ssub.s32 %s12, 1
      %s18 = ssub.s32 %s12, 2
      %s25 = sadd.s32 1, %s20
      %p26 = scmp.ge.s32.totalorder %s25, 1
      %s27 = scalar_select %p26, 0, %s25
      %s28 = sadd.s32 1, %s19
      %s29 = scalar_select %p26, %s28, %s19
      %p30 = scmp.ge.s32.totalorder %s29, 2
      %s31 = scalar_select %p30, 0, %s29
      %s32 = sadd.s32 %s19, %s20
      %s33 = sadd.s32 %s31, %s27
      %s34 = ssub.s32 %s32, %s33
      %p35 = scmp.eq.s32.totalorder %s34, 0
      %s37 = sadd.s32 %s36, 1
      %s38 = scalar_select %p35, %s36, %s37
      %p41 = pneg %p35
      %p42 = scmp.eq.s32.totalorder %s12, 1
      %p43 = por %p41, %p42
      %p44 = scmp.ne.s32.totalorder %s36, %s39
      %p45 = scmp.eq.s32.totalorder %s12, 0
      %p46 = por %p44, %p45
      %p47 = scmp.ne.s32.totalorder %s36, %s39
      %p48 = scmp.eq.s32.totalorder %s17, 1
      %p49 = por %p47, %p48
      %p50 = scmp.ne.s32.totalorder %s39, %s40
      %p51 = scmp.eq.s32.totalorder %s17, 0
      %p52 = por %p50, %p51
      %p53 = scmp.ne.s32.totalorder %s39, %s40
      %p54 = scmp.eq.s32.totalorder %s18, 1
      %p55 = por %p53, %p54
      %p57 = scmp.ne.s32.totalorder %s40, %s56
      %p58 = scmp.eq.s32.totalorder %s18, 0
      %p59 = por %p57, %p58
      %s60 = ssub.s32 %s19, %s31
      %p61 = scmp.eq.s32.totalorder %s60, 0
      %s63 = sadd.s32 %s62, 1
      %s64 = scalar_select %p61, %s62, %s63
      %p67 = pneg %p61
      %p68 = scmp.eq.s32.totalorder %s12, 1
      %p69 = por %p67, %p68
      %p70 = scmp.ne.s32.totalorder %s62, %s65
      %p71 = scmp.eq.s32.totalorder %s12, 0
      %p72 = por %p70, %p71
      %p73 = scmp.ne.s32.totalorder %s62, %s65
      %p74 = scmp.eq.s32.totalorder %s17, 1
      %p75 = por %p73, %p74
      %p76 = scmp.ne.s32.totalorder %s65, %s66
      %p77 = scmp.eq.s32.totalorder %s17, 0
      %p78 = por %p76, %p77
      %p79 = scmp.ne.s32.totalorder %s65, %s66
      %p80 = scmp.eq.s32.totalorder %s18, 1
      %p81 = por %p79, %p80
      %p83 = scmp.ne.s32.totalorder %s66, %s82
      %p84 = scmp.eq.s32.totalorder %s18, 0
      %p85 = por %p83, %p84
      %s86 = ssub.s32 %s19, %s31
      %p87 = scmp.eq.s32.totalorder %s86, 0
      %s89 = sadd.s32 %s88, 1
      %s90 = scalar_select %p87, %s88, %s89
      %p93 = pneg %p87
      %p94 = scmp.eq.s32.totalorder %s12, 1
      %p95 = por %p93, %p94
      %p96 = scmp.ne.s32.totalorder %s88, %s91
      %p97 = scmp.eq.s32.totalorder %s12, 0
      %p98 = por %p96, %p97
      %p99 = scmp.ne.s32.totalorder %s88, %s91
      %p100 = scmp.eq.s32.totalorder %s17, 1
      %p101 = por %p99, %p100
      %p102 = scmp.ne.s32.totalorder %s91, %s92
      %p103 = scmp.eq.s32.totalorder %s17, 0
      %p104 = por %p102, %p103
      %p105 = scmp.ne.s32.totalorder %s91, %s92
      %p106 = scmp.eq.s32.totalorder %s18, 1
      %p107 = por %p105, %p106
      %p109 = scmp.ne.s32.totalorder %s92, %s108
      %p110 = scmp.eq.s32.totalorder %s18, 0
      %p111 = por %p109, %p110
      %p112 = scmp.le.s32.totalorder 1, %s12
      %p113 = scmp.lt.s32.totalorder %s12, 3
      %p114 = pnand %p112, %p113
      %p115 = pneg %p114
      // Predicated region
      $region9: #{tv_loss.1} parent=5 // pred_check
        _
      $region10: #{tv_loss.1} parent=5 // pred_check_branch
        %117 = sbr.rel (%p114) target = $region12
      $region11: #{tv_loss.1} parent=5 // pred_region
        %s118 = ssub.s32 %s12, 1
      $region12: #{tv_loss.1} parent=5 // pred_fallthru
        _
      %p119 = scmp.lt.s32.totalorder %s12, 2
      // Predicated region
      $region13: #{tv_loss.1} parent=5 // pred_check
        %p120 = pneg %p119
      $region14: #{tv_loss.1} parent=5 // pred_check_branch
        %122 = sbr.rel (%p120) target = $region16
      $region15: #{tv_loss.1} parent=5 // pred_region
        // Predicated region
        $region17: #{tv_loss.1} parent=15 // pred_check
          %p123 = pneg %p46
        $region18: #{tv_loss.1} parent=15 // pred_check_branch
          %125 = sbr.rel (%p123) target = $region20
        $region19: #{tv_loss.1} parent=15 // pred_region
          %s126 = sand.u32 %s36, 1
          %s127 = scalar_lea.sflag [#allocation3], %s126
          %s128 = sand.u32 %s36, 1
          %s129 = smul.addr %s128, 64
          %s130 = scalar_lea.vmem [#allocation2], %s129
          %s131 = sadd.s32 %s19, %s20
          %s132 = smul.u32 4, %s131
          %s134 = ssub.s32 1024, 1024
          %135 = vsyncadd %s127, %s134
          %s136 = smul.addr %s132, 2
          %s137 = smul.addr %s136, 128
          %s138 = scalar_lea.hbm %s0, %s137
          %s139 = sshll.u32 %s130, 4
          %s140 = int_to_ptr.vmem [resolvable:$true] %s139
          %145 = dma.hbm_to_vmem [thread:$0]  %s138, 1024, %s140, %s127, 128, 128, 8
        $region20: #{tv_loss.1} parent=15 // pred_fallthru
          _
      $region16: #{tv_loss.1} parent=5 // pred_fallthru
        _
      %p146 = scmp.le.s32.totalorder 1, %s12
      %p147 = scmp.lt.s32.totalorder %s12, 3
      %p148 = pnand %p146, %p147
      %p149 = pneg %p148
      // Predicated region
      $region21: #{tv_loss.1} parent=5 // pred_check
        _
      $region22: #{tv_loss.1} parent=5 // pred_check_branch
        %151 = sbr.rel (%p148) target = $region24
      $region23: #{tv_loss.1} parent=5 // pred_region
        %s152 = ssub.s32 %s12, 1
        %s153 = sand.u32 %s39, 1
        %s154 = scalar_lea.sflag [#allocation3], %s153
        %s155 = sand.u32 %s39, 1
        %s156 = smul.addr %s155, 64
        %s157 = scalar_lea.vmem [#allocation2], %s156
        // Predicated region
        $region25: #{tv_loss.1} parent=23 // pred_check
          %p158 = pneg %p52
        $region26: #{tv_loss.1} parent=23 // pred_check_branch
          %160 = sbr.rel (%p158) target = $region28
        $region27: #{tv_loss.1} parent=23 // pred_region
          %161 = dma.done %s154, 1024
        $region28: #{tv_loss.1} parent=23 // pred_fallthru
          _
        %s162 = sand.u32 %s39, 1
        %s163 = scalar_lea.sflag [#allocation3], %s162
        %s164 = sand.u32 %s39, 1
        %s165 = smul.addr %s164, 64
        %s166 = scalar_lea.vmem [#allocation2], %s165
        %p167 = pneg %p52
        %p168 = pneg %p49
        %p169 = pneg %p78
        %p170 = pneg %p75
        %p171 = scmp.lt.s32.totalorder %s21, 1
        %s172 = scalar_select %p171, %s21, 1
        %s173 = scalar_lea.vmem %s1, %s172
        %p174 = pneg %p104
        %p175 = pneg %p101
        %p176 = scmp.lt.s32.totalorder %s21, 1
        %s177 = scalar_select %p176, %s21, 1
        %s178 = scalar_lea.vmem %s2, %s177
        %s179 = sadd.s32 %s21, %s22
        %s180 = smul.u32 4, %s179
        %p181 = scmp.lt.s32.totalorder %s21, 1
        %s182 = scalar_select %p181, %s21, 1
        %s183 = scalar_lea.vmem %s1, %s182
        %p184 = scmp.lt.s32.totalorder %s21, 1
        %s185 = scalar_select %p184, %s21, 1
        %s186 = scalar_lea.vmem %s2, %s185
        %p187 = scmp.eq.s32.totalorder %s22, 0
        // Predicated region
        $region29: #{tv_loss.1} parent=23 // pred_check
          %p188 = pneg %p187
        $region30: #{tv_loss.1} parent=23 // pred_check_branch
          %190 = sbr.rel (%p188) target = $region32
        $region31: #{tv_loss.1} parent=23 // pred_region
          %vm191 = vcmask 122880
          %192 = vst.msk [vmem:[%s183] sm:$0x1] %vm191, 0.0
          %vm193 = vcmask 114688
          %194 = vst.msk [vmem:[%s186] sm:$0x1] %vm193, 0.0
        $region32: #{tv_loss.1} parent=23 // pred_fallthru
          _
        %v195 = vld [vmem:[%s157] sm:$0xff]
        %v196 = vld [vmem:[%s157 + $0x8] sm:$0xff]
        %v197 = vld [vmem:[%s157 + $0x10] sm:$0xff]
        %v198 = vld [vmem:[%s157 + $0x18] sm:$0xff]
        %v199 = vld [vmem:[%s157 + $0x20] sm:$0xff]
        %v200 = vld [vmem:[%s157 + $0x28] sm:$0xff]
        %v201 = vld [vmem:[%s157 + $0x30] sm:$0xff]
        %v202 = vld [vmem:[%s157 + $0x38] sm:$0xff]
        %vm211 = vcmask 1040384
        %v212 = vrot.slane %v195, 7
        %v213 = vrot.slane %v196, 7
        %v214 = vsel %vm211, %v212, %v213
        %v215 = vrot.slane %v197, 7
        %v216 = vrot.slane %v198, 7
        %v217 = vsel %vm211, %v215, %v216
        %v218 = vrot.slane %v199, 7
        %v219 = vrot.slane %v200, 7
        %v220 = vsel %vm211, %v218, %v219
        %v221 = vrot.slane %v201, 7
        %v222 = vrot.slane %v202, 7
        %v223 = vsel %vm211, %v221, %v222
        %v232 = vsub.f32 %v195, %v212
        %v233 = vsub.f32 %v196, %v214
        %v234 = vsub.f32 %v197, %v215
        %v235 = vsub.f32 %v198, %v217
        %v236 = vsub.f32 %v199, %v218
        %v237 = vsub.f32 %v200, %v220
        %v238 = vsub.f32 %v201, %v221
        %v239 = vsub.f32 %v202, %v223
        %240 = vrot.lane.b32.xlu0 %v195, 1
        %v241 = vpop.permute.xlu0 %240
        %242 = vrot.lane.b32.xlu0 %v196, 1
        %v243 = vpop.permute.xlu0 %242
        %244 = vrot.lane.b32.xlu0 %v197, 1
        %v245 = vpop.permute.xlu0 %244
        %246 = vrot.lane.b32.xlu0 %v198, 1
        %v247 = vpop.permute.xlu0 %246
        %248 = vrot.lane.b32.xlu0 %v199, 1
        %v249 = vpop.permute.xlu0 %248
        %250 = vrot.lane.b32.xlu0 %v200, 1
        %v251 = vpop.permute.xlu0 %250
        %252 = vrot.lane.b32.xlu0 %v201, 1
        %v253 = vpop.permute.xlu0 %252
        %254 = vrot.lane.b32.xlu0 %v202, 1
        %v255 = vpop.permute.xlu0 %254
        %v264 = vsub.f32 %v195, %v241
        %v265 = vsub.f32 %v196, %v243
        %v266 = vsub.f32 %v197, %v245
        %v267 = vsub.f32 %v198, %v247
        %v268 = vsub.f32 %v199, %v249
        %v269 = vsub.f32 %v200, %v251
        %v270 = vsub.f32 %v201, %v253
        %v271 = vsub.f32 %v202, %v255
        %v272 = vmul.f32 %v232, %v232
        %v273 = vmul.f32 %v233, %v233
        %v274 = vmul.f32 %v234, %v234
        %v275 = vmul.f32 %v235, %v235
        %v276 = vmul.f32 %v236, %v236
        %v277 = vmul.f32 %v237, %v237
        %v278 = vmul.f32 %v238, %v238
        %v279 = vmul.f32 %v239, %v239
        %vm280 = vcmask 130049
        %v281 = vsel %vm280, %v272, 0.0
        %v282 = vsel %vm280, %v274, 0.0
        %v283 = vadd.f32 %v281, %v282
        %v284 = vsel %vm280, %v276, 0.0
        %v285 = vadd.f32 %v283, %v284
        %v286 = vsel %vm280, %v278, 0.0
        %v287 = vadd.f32 %v285, %v286
        %vm288 = vcmask 130048
        %v289 = vsel %vm288, %v273, 0.0
        %v290 = vsel %vm288, %v275, 0.0
        %v291 = vadd.f32 %v289, %v290
        %v292 = vsel %vm288, %v277, 0.0
        %v293 = vadd.f32 %v291, %v292
        %v294 = vsel %vm288, %v279, 0.0
        %v295 = vadd.f32 %v293, %v294
        %vm298 = vcmask 1046528
        %v299 = vrot.slane %v287, 1
        %v300 = vrot.slane %v295, 1
        %v301 = vsel %vm298, %v299, %v300
        %v304 = vsel %vm288, %v301, 0.0
        %vm305 = vcmask 129024
        %v306 = vsel %vm305, %v300, 0.0
        %v307 = vadd.f32 %v304, %v306
        %v308 = vrot.slane %v307, 4
        %v309 = vadd.f32 %v307, %v308
        %v310 = vrot.slane %v309, 2
        %v311 = vadd.f32 %v309, %v310
        %v312 = vrot.slane %v311, 1
        %v313 = vadd.f32 %v311, %v312
        %v314 = vmul.f32 %v264, %v264
        %v315 = vmul.f32 %v265, %v265
        %v316 = vmul.f32 %v266, %v266
        %v317 = vmul.f32 %v267, %v267
        %v318 = vmul.f32 %v268, %v268
        %v319 = vmul.f32 %v269, %v269
        %v320 = vmul.f32 %v270, %v270
        %v321 = vmul.f32 %v271, %v271
        %vm322 = vcmask 130056
        %v323 = vsel %vm322, %v314, 0.0
        %v324 = vsel %vm322, %v316, 0.0
        %v325 = vadd.f32 %v323, %v324
        %v326 = vsel %vm322, %v318, 0.0
        %v327 = vadd.f32 %v325, %v326
        %v328 = vsel %vm322, %v320, 0.0
        %v329 = vadd.f32 %v327, %v328
        %v330 = vsel %vm322, %v315, 0.0
        %v331 = vsel %vm322, %v317, 0.0
        %v332 = vadd.f32 %v330, %v331
        %v333 = vsel %vm322, %v319, 0.0
        %v334 = vadd.f32 %v332, %v333
        %v335 = vsel %vm322, %v321, 0.0
        %v336 = vadd.f32 %v334, %v335
        %v337 = vsel %vm322, %v329, 0.0
        %v338 = vsel %vm322, %v336, 0.0
        %v339 = vadd.f32 %v337, %v338
        %v340 = vrot.slane %v339, 4
        %v341 = vadd.f32 %v339, %v340
        %v342 = vrot.slane %v341, 2
        %v343 = vadd.f32 %v341, %v342
        %v344 = vrot.slane %v343, 1
        %v345 = vadd.f32 %v343, %v344
        %v346 = vld [vmem:[%s183] sm:$0x1]
        %v347 = vadd.f32 %v346, %v313
        %vm348 = vcmask 122880
        %349 = vst.msk [vmem:[%s183] sm:$0x1] %vm348, %v347
        %v350 = vld [vmem:[%s186] sm:$0x1]
        %v353 = vunpack.c.l.s4 1966171168
        %v354 = vunpack.c.0.s8 %v353
        %v355 = vlaneseq
        %v356 = vshrl.u32 %v355, 7
        %v357 = vsub.s32 %v354, %v356
        %v358 = vrot.slane %v345, %v357
        %v360 = vunpack.c.l.s4 1966171168
        %v361 = vunpack.c.0.s8 %v360
        %v362 = vlaneseq
        %v363 = vshrl.u32 %v362, 7
        %v364 = vsub.s32 %v361, %v363
        %v365 = vrot.slane %v358, %v364
        %366 = vrot.lane.b32.xlu0 %v365, 127
        %v367 = vpop.permute.xlu0 %366
        %v369 = vadd.f32 %v350, %v367
        %vm370 = vcmask 114688
        %371 = vst.msk [vmem:[%s186] sm:$0x1] %vm370, %v369
        %p372 = scmp.lt.s32.totalorder %s21, 1
        %s373 = scalar_select %p372, %s21, 1
        %s374 = scalar_lea.vmem %s1, %s373
        %p375 = scmp.lt.s32.totalorder %s21, 1
        %s376 = scalar_select %p375, %s21, 1
        %s377 = scalar_lea.vmem %s2, %s376
        // Predicated region
        $region33: #{tv_loss.1} parent=23 // pred_check
          %p378 = pneg %p75
        $region34: #{tv_loss.1} parent=23 // pred_check_branch
          %380 = sbr.rel (%p378) target = $region36
        $region35: #{tv_loss.1} parent=23 // pred_region
          _
        $region36: #{tv_loss.1} parent=23 // pred_fallthru
          _
        // Predicated region
        $region37: #{tv_loss.1} parent=23 // pred_check
          %p381 = pneg %p101
        $region38: #{tv_loss.1} parent=23 // pred_check_branch
          %383 = sbr.rel (%p381) target = $region40
        $region39: #{tv_loss.1} parent=23 // pred_region
          _
        $region40: #{tv_loss.1} parent=23 // pred_fallthru
          _
      $region24: #{tv_loss.1} parent=5 // pred_fallthru
        _
      %p384 = scmp.le.s32.totalorder 2, %s12
      // Predicated region
      $region41: #{tv_loss.1} parent=5 // pred_check
        %p385 = pneg %p384
      $region42: #{tv_loss.1} parent=5 // pred_check_branch
        %387 = sbr.rel (%p385) target = $region44
      $region43: #{tv_loss.1} parent=5 // pred_region
        %s388 = ssub.s32 %s12, 2
        // Predicated region
        $region45: #{tv_loss.1} parent=43 // pred_check
          %p389 = pneg %p81
        $region46: #{tv_loss.1} parent=43 // pred_check_branch
          %391 = sbr.rel (%p389) target = $region48
        $region47: #{tv_loss.1} parent=43 // pred_region
          %p392 = scmp.lt.s32.totalorder %s23, 1
          %s393 = scalar_select %p392, %s23, 1
          %s394 = scalar_lea.vmem %s1, %s393
        $region48: #{tv_loss.1} parent=43 // pred_fallthru
          _
        // Predicated region
        $region49: #{tv_loss.1} parent=43 // pred_check
          %p395 = pneg %p107
        $region50: #{tv_loss.1} parent=43 // pred_check_branch
          %397 = sbr.rel (%p395) target = $region52
        $region51: #{tv_loss.1} parent=43 // pred_region
          %p398 = scmp.lt.s32.totalorder %s23, 1
          %s399 = scalar_select %p398, %s23, 1
          %s400 = scalar_lea.vmem %s2, %s399
        $region52: #{tv_loss.1} parent=43 // pred_fallthru
          _
      $region44: #{tv_loss.1} parent=5 // pred_fallthru
        _
    $region6: #{tv_loss.1} parent=1 // loop_footer
      %s16 = sadd.s32 1, %s12
    $region7: #{tv_loss.1} parent=1 // loop_footer_branch
      %11 = sbr.rel target = $region3
    $region8: #{tv_loss.1} parent=1 // loop_exit
      _
    %401 = vsyncpa [#allocation3], 1
    %s402 = scalar_lea.sflag [#allocation3], 1
    %403 = vsyncpa %s402, 1

</llo_original>
